<compile_context>
chip_gen: v7x
topology: tpu7x:2x2x1
jax: 0.10.0
libtpu: 0.0.40
codegen_flags: <defaults>
</compile_context>

<pallas_src>
import functools

import jax
import jax.numpy as jnp
from jax.experimental import pallas as pl
from jax.experimental.pallas import tpu as pltpu

LN_EPS = 1e-5  # torch.nn.LayerNorm default


def _round_up(x, m):
    return ((x + m - 1) // m) * m


def _cdiv(a, b):
    return (a + b - 1) // b


def _pick_pack(embed_dim):
    # Pack enough logical rows into one vector row to reach ~128 lanes.
    if embed_dim >= 128:
        return 1
    return max(1, 128 // embed_dim)


def _eeg_encoder_kernel(x_ref, w_ref, pgb_ref, m_ref, o_ref, *, ln_precision=None):
    # x_ref : (t4, pack*eeg)       packed input rows (pack logical rows / vector row)
    # w_ref : (pack*eeg, pack*E)   block-diagonal weight (VMEM resident)
    # pgb_ref: (3, pack*E)         rows = [linear bias, LN gamma, LN beta] (resident)
    # m_ref : (pack*E, pack*E)     block-diag chunk-averaging matrix, 1/E (resident)
    # o_ref : (t4, pack*E)         lane-dense output
    w = w_ref[...]
    # Cast the activation tile to the weight dtype *inside* VMEM (free compared
    # to a wrapper-side HBM cast pass); MXU accumulates in f32.
    h = jnp.dot(x_ref[...].astype(w.dtype), w, preferred_element_type=jnp.float32)
    h = h + pgb_ref[0:1, :]

    # Per-chunk LayerNorm stats via two INDEPENDENT small matmuls against the
    # averaging matrix: var = E[h^2] - mean^2 (no serialized MXU round trip).
    # Pass ln_precision=jax.lax.Precision.HIGHEST if tighter LN stats are needed.
    m = m_ref[...]
    mean = jnp.dot(h, m, preferred_element_type=jnp.float32, precision=ln_precision)
    ex2 = jnp.dot(h * h, m, preferred_element_type=jnp.float32, precision=ln_precision)
    var = jnp.maximum(ex2 - mean * mean, 0.0)

    y = (h - mean) * jax.lax.rsqrt(var + LN_EPS)   # biased var, eps inside rsqrt (torch)
    y = y * pgb_ref[1:2, :] + pgb_ref[2:3, :]
    # ReLU; Dropout(p=0.3) is identity in eval mode.
    o_ref[...] = jnp.maximum(y, 0.0).astype(o_ref.dtype)


def eeg_encoder(x, w, b, gamma, beta, *, tile_m=16384, compute_dtype=None,
                out_dtype=None, x_buffers=2, ln_precision=None,
                vmem_budget_bytes=40 << 20):
    """Fused Linear + LayerNorm + ReLU (+ eval-mode Dropout).

    x: [B, eeg_dim]; w: [eeg_dim, embed_dim] (pre-transposed vs torch Linear);
    b/gamma/beta: [embed_dim].
    tile_m        : batch rows per grid step (main knob; auto-clamped to the
                    VMEM budget and to >=2 grid steps when possible, for v7x).
    compute_dtype : e.g. jnp.bfloat16 -> resident weight in bf16, activation
                    tile cast in-kernel (no extra HBM pass on x).
    out_dtype     : output dtype; bf16 halves writeback bytes if tolerated
                    downstream (default x.dtype for exact module semantics).
    x_buffers     : pipeline depth for the x stream (pl.Buffered); 2 = default.
    Call under jax.jit so the packed parameter construction constant-folds.
    """
    B, eeg_dim = x.shape
    embed_dim = w.shape[1]
    out_dtype = jnp.dtype(out_dtype) if out_dtype is not None else jnp.dtype(x.dtype)
    w_dtype = jnp.dtype(compute_dtype) if compute_dtype is not None else jnp.dtype(x.dtype)
    x_it = jnp.dtype(x.dtype).itemsize
    w_it = w_dtype.itemsize
    out_it = out_dtype.itemsize

    pack = _pick_pack(embed_dim)            # 4 for embed_dim=32 -> 128 output lanes
    lane_in = pack * eeg_dim
    lane_out = pack * embed_dim
    # bf16 tiles need 16 sublanes in the packed row dim; f32 needs 8.
    sub = 8 if (x_it == 4 and out_it == 4) else 16
    align = sub * pack                      # tile_m granularity

    # Pad only to a multiple of `pack` (<= pack-1 rows); tiny batches are padded
    # to one minimal tile.  Aligned batches take zero extra HBM passes; ragged
    # last grid blocks are handled by Pallas masking (no full-batch pad/slice).
    B_pack = _round_up(B, pack)
    if B_pack < align:
        B_pack = align
    rows = B_pack // pack

    # --- tile sizing -------------------------------------------------------
    # VMEM bytes per tile_m row: input buffers + output buffers + f32 temporaries
    # (h, h^2, stats, y chain) + a possible in-VMEM activation cast.
    n_buf_in = max(2, int(x_buffers))
    per_row = (n_buf_in * eeg_dim * x_it + 2 * embed_dim * out_it
               + 8 * embed_dim * 4 + eeg_dim * w_it)
    max_tile = max(align, (int(vmem_budget_bytes) // per_row) // align * align)
    tile_cap = (B_pack // align) * align            # keep block <= array rows
    tile_m = min(int(tile_m), max_tile, tile_cap)
    if B_pack >= 2 * align:                         # >=2 grid steps -> v7x 2-TC sharding
        tile_m = min(tile_m, _round_up(_cdiv(B_pack, 2), align))
    tile_m = max(align, (tile_m // align) * align)
    t4 = tile_m // pack                             # packed rows per grid step
    grid = (_cdiv(rows, t4),)

    resident_bytes = lane_in * lane_out * w_it + 3 * lane_out * 4 + lane_out * lane_out * 4
    vmem_limit = int(min(56 << 20,                  # below v7x's 64 MiB physical VMEM
                         max(32 << 20, tile_m * per_row + resident_bytes + (4 << 20))))

    # --- packed operands ---------------------------------------------------
    x_p = x
    if B_pack != B:
        x_p = jnp.pad(x_p, ((0, B_pack - B), (0, 0)))   # only for pack/tiny-batch misalignment
    x_v = x_p.reshape(rows, lane_in)                    # free row-major view

    w_big = jnp.kron(jnp.eye(pack, dtype=jnp.float32),
                     w.astype(jnp.float32)).astype(w_dtype)        # block-diag weight
    pgb = jnp.stack([jnp.tile(b.astype(jnp.float32), pack),
                     jnp.tile(gamma.astype(jnp.float32), pack),
                     jnp.tile(beta.astype(jnp.float32), pack)])    # (3, pack*E)
    chunk = jnp.arange(lane_out) // embed_dim
    m_avg = (chunk[:, None] == chunk[None, :]).astype(jnp.float32) / embed_dim

    x_spec_kwargs = {}
    if n_buf_in != 2:
        x_spec_kwargs["pipeline_mode"] = pl.Buffered(n_buf_in)
    x_spec = pl.BlockSpec((t4, lane_in), lambda i: (i, 0), **x_spec_kwargs)

    out_v = pl.pallas_call(
        functools.partial(_eeg_encoder_kernel, ln_precision=ln_precision),
        out_shape=jax.ShapeDtypeStruct((rows, lane_out), out_dtype),
        grid_spec=pl.GridSpec(
            grid=grid,
            in_specs=[
                x_spec,                                                   # x tile (streamed)
                pl.BlockSpec((lane_in, lane_out), lambda i: (0, 0)),      # W (resident)
                pl.BlockSpec((3, lane_out), lambda i: (0, 0)),            # bias/gamma/beta
                pl.BlockSpec((lane_out, lane_out), lambda i: (0, 0)),     # avg matrix
            ],
            out_specs=pl.BlockSpec((t4, lane_out), lambda i: (i, 0)),
        ),
        compiler_params=pltpu.CompilerParams(
            dimension_semantics=("parallel",),
            vmem_limit_bytes=vmem_limit),
    )(x_v, w_big, pgb, m_avg)

    out = out_v.reshape(B_pack, embed_dim)
    return out if B_pack == B else out[:B]


def eeg_encoder_ref(x, w, b, gamma, beta):
    """Pure-JAX reference (eval-mode dropout)."""
    h = x @ w + b
    mean = jnp.mean(h, axis=-1, keepdims=True)
    var = jnp.mean((h - mean) ** 2, axis=-1, keepdims=True)
    y = (h - mean) / jnp.sqrt(var + LN_EPS) * gamma + beta
    return jnp.maximum(y, 0.0)


if __name__ == "__main__":
    EEG_DIM, EMBED_DIM = 64, 32

    key = jax.random.PRNGKey(0)
    k_x, k_w, k_b, k_x2, k_x3 = jax.random.split(key, 5)

    bound = 1.0 / (EEG_DIM ** 0.5)
    w = jax.random.uniform(k_w, (EEG_DIM, EMBED_DIM), jnp.float32, -bound, bound)
    b = jax.random.uniform(k_b, (EMBED_DIM,), jnp.float32, -bound, bound)
    gamma = jnp.ones((EMBED_DIM,), jnp.float32)   # LayerNorm default weight
    beta = jnp.zeros((EMBED_DIM,), jnp.float32)   # LayerNorm default bias

    # 1) Tiny batch, f32, default knobs (single minimal tile).
    B = 8
    x = jax.random.normal(k_x, (B, EEG_DIM), jnp.float32)
    enc1 = jax.jit(lambda a: eeg_encoder(a, w, b, gamma, beta))
    out = jax.block_until_ready(enc1(x))
    ref = eeg_encoder_ref(x, w, b, gamma, beta)
    assert out.shape == (B, EMBED_DIM)
    assert jnp.allclose(out, ref, atol=3e-4, rtol=3e-4), "f32 mismatch vs reference"

    # 2) Non-tile-aligned batch + multi-step ragged grid (forced small tile_m).
    B2 = 200
    x2 = jax.random.normal(k_x2, (B2, EEG_DIM), jnp.float32)
    enc2 = jax.jit(lambda a: eeg_encoder(a, w, b, gamma, beta, tile_m=64))
    out2 = jax.block_until_ready(enc2(x2))
    ref2 = eeg_encoder_ref(x2, w, b, gamma, beta)
    assert out2.shape == (B2, EMBED_DIM)
    assert jnp.allclose(out2, ref2, atol=3e-4, rtol=3e-4), "ragged-grid mismatch"

    # 3) Default knobs with enough rows for >=2 grid steps (v7x 2-TC sharding path).
    B3 = 1024
    x3 = jax.random.normal(k_x3, (B3, EEG_DIM), jnp.float32)
    enc3 = jax.jit(lambda a: eeg_encoder(a, w, b, gamma, beta))
    out3 = jax.block_until_ready(enc3(x3))
    ref3 = eeg_encoder_ref(x3, w, b, gamma, beta)
    assert jnp.allclose(out3, ref3, atol=3e-4, rtol=3e-4), "default-tile mismatch"

    # 4) bf16 weights/MXU + bf16 writeback (x stays f32 in HBM - no wrapper cast).
    enc4 = jax.jit(lambda a: eeg_encoder(a, w, b, gamma, beta,
                                         compute_dtype=jnp.bfloat16,
                                         out_dtype=jnp.bfloat16))
    out4 = jax.block_until_ready(enc4(x))
    assert out4.dtype == jnp.bfloat16
    assert jnp.allclose(out4.astype(jnp.float32), ref, atol=5e-2, rtol=5e-2), \
        "bf16 path mismatch"

    print("KERNEL_OK")
</pallas_src>

<mosaic_0001>
module attributes {stable_mosaic.version = 11 : i64} {
  func.func @_eeg_encoder_kernel(%arg0: i32, %arg1: memref<8x256xf32, #tpu.memory_space<vmem>>, %arg2: memref<256x128xf32, #tpu.memory_space<vmem>>, %arg3: memref<3x128xf32, #tpu.memory_space<vmem>>, %arg4: memref<128x128xf32, #tpu.memory_space<vmem>>, %arg5: memref<8x128xf32, #tpu.memory_space<vmem>>) attributes {dimension_semantics = [#tpu.dimension_semantics<parallel>], iteration_bounds = array<i64: 1>, scalar_prefetch = 0 : i64, scratch_operands = 0 : i64, tpu.core_type = #tpu.core_type<tc>, window_params = [{transform_indices = @transform_0, window_bounds = array<i64: 8, 256>}, {pipeline_mode = #tpu.pipeline_mode<synchronous>, transform_indices = @transform_1, window_bounds = array<i64: 256, 128>}, {pipeline_mode = #tpu.pipeline_mode<synchronous>, transform_indices = @transform_2, window_bounds = array<i64: 3, 128>}, {pipeline_mode = #tpu.pipeline_mode<synchronous>, transform_indices = @transform_3, window_bounds = array<i64: 128, 128>}, {transform_indices = @transform_4, window_bounds = array<i64: 8, 128>}]} {
    %c0 = arith.constant 0 : index
    %c0_0 = arith.constant 0 : index
    %0 = vector.load %arg2[%c0, %c0_0] : memref<256x128xf32, #tpu.memory_space<vmem>>, vector<256x128xf32>
    %c0_1 = arith.constant 0 : index
    %c0_2 = arith.constant 0 : index
    %1 = vector.load %arg1[%c0_1, %c0_2] : memref<8x256xf32, #tpu.memory_space<vmem>>, vector<8x256xf32>
    %cst = arith.constant dense<0.000000e+00> : vector<8x128xf32>
    %2 = tpu.matmul %1, %0, %cst {dimension_numbers = #tpu.dot_dimension_numbers<[1], [0], [0], [1], [0, 0, 1, 1], [], []>} : vector<8x256xf32>, vector<256x128xf32>, vector<8x128xf32> -> vector<8x128xf32>
    %c0_3 = arith.constant 0 : index
    %c0_4 = arith.constant 0 : index
    %3 = vector.load %arg3[%c0_3, %c0_4] : memref<3x128xf32, #tpu.memory_space<vmem>>, vector<1x128xf32>
    %4 = vector.broadcast %3 : vector<1x128xf32> to vector<8x128xf32>
    %5 = arith.addf %2, %4 : vector<8x128xf32>
    %c0_5 = arith.constant 0 : index
    %c0_6 = arith.constant 0 : index
    %6 = vector.load %arg4[%c0_5, %c0_6] : memref<128x128xf32, #tpu.memory_space<vmem>>, vector<128x128xf32>
    %cst_7 = arith.constant dense<0.000000e+00> : vector<8x128xf32>
    %7 = tpu.matmul %5, %6, %cst_7 {dimension_numbers = #tpu.dot_dimension_numbers<[1], [0], [0], [1], [0, 0, 1, 1], [], []>} : vector<8x128xf32>, vector<128x128xf32>, vector<8x128xf32> -> vector<8x128xf32>
    %8 = arith.mulf %5, %5 : vector<8x128xf32>
    %cst_8 = arith.constant dense<0.000000e+00> : vector<8x128xf32>
    %9 = tpu.matmul %8, %6, %cst_8 {dimension_numbers = #tpu.dot_dimension_numbers<[1], [0], [0], [1], [0, 0, 1, 1], [], []>} : vector<8x128xf32>, vector<128x128xf32>, vector<8x128xf32> -> vector<8x128xf32>
    %10 = arith.mulf %7, %7 : vector<8x128xf32>
    %11 = arith.subf %9, %10 : vector<8x128xf32>
    %cst_9 = arith.constant 0.000000e+00 : f32
    %12 = vector.broadcast %cst_9 : f32 to vector<8x128xf32>
    %13 = arith.maximumf %11, %12 : vector<8x128xf32>
    %14 = arith.subf %5, %7 : vector<8x128xf32>
    %cst_10 = arith.constant 9.99999974E-6 : f32
    %15 = vector.broadcast %cst_10 : f32 to vector<8x128xf32>
    %16 = arith.addf %13, %15 : vector<8x128xf32>
    %17 = math.rsqrt %16 : vector<8x128xf32>
    %18 = arith.mulf %14, %17 : vector<8x128xf32>
    %c1 = arith.constant 1 : index
    %c0_11 = arith.constant 0 : index
    %19 = vector.load %arg3[%c1, %c0_11] : memref<3x128xf32, #tpu.memory_space<vmem>>, vector<1x128xf32>
    %20 = vector.broadcast %19 : vector<1x128xf32> to vector<8x128xf32>
    %21 = arith.mulf %18, %20 : vector<8x128xf32>
    %c2 = arith.constant 2 : index
    %c0_12 = arith.constant 0 : index
    %22 = vector.load %arg3[%c2, %c0_12] : memref<3x128xf32, #tpu.memory_space<vmem>>, vector<1x128xf32>
    %23 = vector.broadcast %22 : vector<1x128xf32> to vector<8x128xf32>
    %24 = arith.addf %21, %23 : vector<8x128xf32>
    %cst_13 = arith.constant 0.000000e+00 : f32
    %25 = vector.broadcast %cst_13 : f32 to vector<8x128xf32>
    %26 = arith.maximumf %24, %25 : vector<8x128xf32>
    %c0_14 = arith.constant 0 : index
    %c0_15 = arith.constant 0 : index
    %27 = vector.load %arg5[%c0_14, %c0_15] : memref<8x128xf32, #tpu.memory_space<vmem>>, vector<8x128xf32>
    tpu.vector_store %arg5[%c0_14, %c0_15], %26 {strides = array<i32>} : memref<8x128xf32, #tpu.memory_space<vmem>>, vector<8x128xf32>,
    return
  }
  func.func @transform_0(%arg0: i32) -> (i32, i32) {
    %c0_i32 = arith.constant 0 : i32
    %c0_i32_0 = arith.constant 0 : i32
    return %arg0, %c0_i32 : i32, i32
  }
  func.func @transform_1(%arg0: i32) -> (i32, i32) {
    %c0_i32 = arith.constant 0 : i32
    %c0_i32_0 = arith.constant 0 : i32
    %c0_i32_1 = arith.constant 0 : i32
    return %c0_i32, %c0_i32_0 : i32, i32
  }
  func.func @transform_2(%arg0: i32) -> (i32, i32) {
    %c0_i32 = arith.constant 0 : i32
    %c0_i32_0 = arith.constant 0 : i32
    %c0_i32_1 = arith.constant 0 : i32
    return %c0_i32, %c0_i32_0 : i32, i32
  }
  func.func @transform_3(%arg0: i32) -> (i32, i32) {
    %c0_i32 = arith.constant 0 : i32
    %c0_i32_0 = arith.constant 0 : i32
    %c0_i32_1 = arith.constant 0 : i32
    return %c0_i32, %c0_i32_0 : i32, i32
  }
  func.func @transform_4(%arg0: i32) -> (i32, i32) {
    %c0_i32 = arith.constant 0 : i32
    %c0_i32_0 = arith.constant 0 : i32
    return %arg0, %c0_i32 : i32, i32
  }
}

</mosaic_0001>

<llo_original>
// kernel: tile.10
$region0: #{tile.10}
  #allocation0 [shape = 's32[1]{0}', space=sflag, size = 0x4, scoped, tag = 'scoped memory for tile.10']
  %s0 = inlined_call_operand.vmem [shape: f32[32], index: 0, kind: input, shape index: {}]
  %s1 = inlined_call_operand.vmem [shape: f32[4,32], index: 1, kind: output, shape index: {}]
  // Predicated region
  $region2: #{tile.10} parent=0 // pred_check
    _
  $region3: #{tile.10} parent=0 // pred_check_branch
    %3 = sbr.rel (0) target = $region5
  $region4: #{tile.10} parent=0 // pred_region
    _
  $region5: #{tile.10} parent=0 // pred_fallthru
    _
  %v4 = vld [vmem:[%s0] ss:$0 sm:$0xff]
  %5 = vst [vmem:[%s1] sm:$0xf] %v4

// kernel: tile.11
$region0: #{tile.11}
  %s0 = inlined_call_operand.vmem [shape: f32[4,32], index: 0, kind: input, shape index: {}]
  %s1 = inlined_call_operand.vmem [shape: f32[1,128], index: 1, kind: output, shape index: {}]
  $region1: #{tile.11} parent=0
    #allocation0 [shape = 'u8[4096]{0}', space=vmem, size = 0x1000, scoped, tag = 'scoped mem for output reshape']
    #allocation1 [shape = 'u8[4096]{0}', space=vmem, size = 0x1000, scoped, tag = 'scoped mem for input reshape']
    %s3 = sshllo.u32 0, 4
    %v4 = vld [vmem:[%s0] sm:%s3]
    %5 = vst [vmem:[#allocation1] sm:%s3] %v4
    %v6 = vld [vmem:[#allocation1] sm:$0x1]
    %vm7 = vcmask 261120
    %8 = vst.msk [vmem:[#allocation0] sm:$0x1] %vm7, %v6
    %s9 = scalar_lea.vmem [#allocation1], 3
    %v10 = vld [vmem:[%s9] sm:$0x1]
    %11 = vrot.lane.b32.xlu0 %v10, 96
    %v12 = vpop.permute.xlu0 %11
    %vm13 = vcmask 1048320
    %14 = vst.msk [vmem:[#allocation0] sm:$0x1] %vm13, %v12
    %s15 = scalar_lea.vmem [#allocation1], 2
    %v16 = vld [vmem:[%s15] sm:$0x1]
    %17 = vrot.lane.b32.xlu0 %v16, 64
    %v18 = vpop.permute.xlu0 %17
    %vm19 = vcmask 785920
    %20 = vst.msk [vmem:[#allocation0] sm:$0x1] %vm19, %v18
    %s21 = scalar_lea.vmem [#allocation1], 1
    %v22 = vld [vmem:[%s21] sm:$0x1]
    %23 = vrot.lane.b32.xlu0 %v22, 32
    %v24 = vpop.permute.xlu0 %23
    %vm25 = vcmask 523520
    %26 = vst.msk [vmem:[#allocation0] sm:$0x1] %vm25, %v24
    %s28 = sshllo.u32 0, 1
    %v30 = vld [vmem:[#allocation0] sm:%s28]
    %s31 = sshllo.u32 0, 1
    %32 = vst [vmem:[%s1] sm:%s31] %v30

// kernel: _lambda_.1
$region0: #{_lambda_.1}
  #allocation0 [shape = 'u32[]', space=smem, size = 0x4, offset = 0x4, fixed_abs, tag = 'smem constant byte address 0x4 - core index']
  #allocation1 [shape = 'u32[144,128]{1,0:T(1,128)}', space=vmem, size = 0x12000, scoped, tag = 'internal scratch']
  %s0 = inlined_call_operand.vmem [shape: f32[8,256], index: 0, kind: input, shape index: {}]
  %s1 = inlined_call_operand.vmem [shape: f32[256,128], index: 1, kind: input, shape index: {}]
  %s2 = inlined_call_operand.vmem [shape: f32[3,128], index: 2, kind: input, shape index: {}]
  %s3 = inlined_call_operand.vmem [shape: f32[128,128], index: 3, kind: input, shape index: {}]
  %s4 = inlined_call_operand.vmem [shape: f32[8,128], index: 4, kind: output, shape index: {}]
  %s5 = sld [smem:[#allocation0]]
  $region26: #{_lambda_.1} parent=0
    _
  %s7 = ssub.s32 1, %s5
  %s8 = scalar_select 0, %s7, %s5
  // Predicated region
  $region2: #{_lambda_.1} parent=0 // pred_check
    _
  $region3: #{_lambda_.1} parent=0 // pred_check_branch
    %10 = sbr.rel (0) target = $region5
  $region4: #{_lambda_.1} parent=0 // pred_region
    _
  $region5: #{_lambda_.1} parent=0 // pred_fallthru
    _
  // Predicated region
  $region6: #{_lambda_.1} parent=0 // pred_check
    _
  $region7: #{_lambda_.1} parent=0 // pred_check_branch
    %12 = sbr.rel (0) target = $region9
  $region8: #{_lambda_.1} parent=0 // pred_region
    _
  $region9: #{_lambda_.1} parent=0 // pred_fallthru
    _
  // Predicated region
  $region10: #{_lambda_.1} parent=0 // pred_check
    _
  $region11: #{_lambda_.1} parent=0 // pred_check_branch
    %14 = sbr.rel (0) target = $region13
  $region12: #{_lambda_.1} parent=0 // pred_region
    _
  $region13: #{_lambda_.1} parent=0 // pred_fallthru
    _
  // Predicated region
  $region14: #{_lambda_.1} parent=0 // pred_check
    _
  $region15: #{_lambda_.1} parent=0 // pred_check_branch
    %16 = sbr.rel (0) target = $region17
  $region16: #{_lambda_.1} parent=0 // pred_region
    _
  $region17: #{_lambda_.1} parent=0 // pred_fallthru
    _
  %v17 = vld [vmem:[%s1] sm:$0xff]
  %v18 = vld [vmem:[%s1 + $0x8] sm:$0xff]
  %v19 = vld [vmem:[%s1 + $0x10] sm:$0xff]
  %v20 = vld [vmem:[%s1 + $0x18] sm:$0xff]
  %v21 = vld [vmem:[%s1 + $0x20] sm:$0xff]
  %v22 = vld [vmem:[%s1 + $0x28] sm:$0xff]
  %v23 = vld [vmem:[%s1 + $0x30] sm:$0xff]
  %v24 = vld [vmem:[%s1 + $0x38] sm:$0xff]
  %v25 = vld [vmem:[%s1 + $0x40] sm:$0xff]
  %v26 = vld [vmem:[%s1 + $0x48] sm:$0xff]
  %v27 = vld [vmem:[%s1 + $0x50] sm:$0xff]
  %v28 = vld [vmem:[%s1 + $0x58] sm:$0xff]
  %v29 = vld [vmem:[%s1 + $0x60] sm:$0xff]
  %v30 = vld [vmem:[%s1 + $0x68] sm:$0xff]
  %v31 = vld [vmem:[%s1 + $0x70] sm:$0xff]
  %v32 = vld [vmem:[%s1 + $0x78] sm:$0xff]
  %v33 = vld [vmem:[%s1 + $0x80] sm:$0xff]
  %v34 = vld [vmem:[%s1 + $0x88] sm:$0xff]
  %v35 = vld [vmem:[%s1 + $0x90] sm:$0xff]
  %v36 = vld [vmem:[%s1 + $0x98] sm:$0xff]
  %v37 = vld [vmem:[%s1 + $0xa0] sm:$0xff]
  %v38 = vld [vmem:[%s1 + $0xa8] sm:$0xff]
  %v39 = vld [vmem:[%s1 + $0xb0] sm:$0xff]
  %v40 = vld [vmem:[%s1 + $0xb8] sm:$0xff]
  %v41 = vld [vmem:[%s1 + $0xc0] sm:$0xff]
  %v42 = vld [vmem:[%s1 + $0xc8] sm:$0xff]
  %v43 = vld [vmem:[%s1 + $0xd0] sm:$0xff]
  %v44 = vld [vmem:[%s1 + $0xd8] sm:$0xff]
  %v45 = vld [vmem:[%s1 + $0xe0] sm:$0xff]
  %v46 = vld [vmem:[%s1 + $0xe8] sm:$0xff]
  %v47 = vld [vmem:[%s1 + $0xf0] sm:$0xff]
  %v48 = vld [vmem:[%s1 + $0xf8] sm:$0xff]
  %v49 = vld [vmem:[%s0] sm:$0xff]
  %v50 = vld [vmem:[%s0 + $0x8] sm:$0xff]
  %v51 = vld [vmem:[%s2] sm:$0x1]
  %v52 = vlaneseq
  %v53 = vshrl.u32 %v52, 7
  %v54 = vsub.s32 0, %v53
  %v55 = vrot.slane %v51, %v54
  %56 = vmatprep.subr.mxu0 0.0
  %57 = vmatpush1.msra.mxu0 %v17
  %58 = vmatprep.subr.mxu0 0.0
  %59 = vmatpush1.msra.mxu0 %v18
  %60 = vmatprep.subr.mxu0 0.0
  %61 = vmatpush1.msra.mxu0 %v19
  %62 = vmatprep.subr.mxu0 0.0
  %63 = vmatpush1.msra.mxu0 %v20
  %64 = vmatprep.subr.mxu0 0.0
  %65 = vmatpush1.msra.mxu0 %v21
  %66 = vmatprep.subr.mxu0 0.0
  %67 = vmatpush1.msra.mxu0 %v22
  %68 = vmatprep.subr.mxu0 0.0
  %69 = vmatpush1.msra.mxu0 %v23
  %70 = vmatprep.subr.mxu0 0.0
  %71 = vmatpush1.msra.mxu0 %v24
  %72 = vmatprep.subr.mxu0 0.0
  %73 = vmatpush1.msra.mxu0 %v25
  %74 = vmatprep.subr.mxu0 0.0
  %75 = vmatpush1.msra.mxu0 %v26
  %76 = vmatprep.subr.mxu0 0.0
  %77 = vmatpush1.msra.mxu0 %v27
  %78 = vmatprep.subr.mxu0 0.0
  %79 = vmatpush1.msra.mxu0 %v28
  %80 = vmatprep.subr.mxu0 0.0
  %81 = vmatpush1.msra.mxu0 %v29
  %82 = vmatprep.subr.mxu0 0.0
  %83 = vmatpush1.msra.mxu0 %v30
  %84 = vmatprep.subr.mxu0 0.0
  %85 = vmatpush1.msra.mxu0 %v31
  %86 = vmatprep.subr.mxu0 0.0
  %87 = vmatpush1.msra.mxu0 %v32
  %88 = vmatprep.subr.mxu0 0.0
  %89 = vmatpush1.msra.mxu0 %v33
  %90 = vmatprep.subr.mxu0 0.0
  %91 = vmatpush1.msra.mxu0 %v34
  %92 = vmatprep.subr.mxu0 0.0
  %93 = vmatpush1.msra.mxu0 %v35
  %94 = vmatprep.subr.mxu0 0.0
  %95 = vmatpush1.msra.mxu0 %v36
  %96 = vmatprep.subr.mxu0 0.0
  %97 = vmatpush1.msra.mxu0 %v37
  %98 = vmatprep.subr.mxu0 0.0
  %99 = vmatpush1.msra.mxu0 %v38
  %100 = vmatprep.subr.mxu0 0.0
  %101 = vmatpush1.msra.mxu0 %v39
  %102 = vmatprep.subr.mxu0 0.0
  %103 = vmatpush1.msra.mxu0 %v40
  %104 = vmatprep.subr.mxu0 0.0
  %105 = vmatpush1.msra.mxu0 %v41
  %106 = vmatprep.subr.mxu0 0.0
  %107 = vmatpush1.msra.mxu0 %v42
  %108 = vmatprep.subr.mxu0 0.0
  %109 = vmatpush1.msra.mxu0 %v43
  %110 = vmatprep.subr.mxu0 0.0
  %111 = vmatpush1.msra.mxu0 %v44
  %112 = vmatprep.subr.mxu0 0.0
  %113 = vmatpush1.msra.mxu0 %v45
  %114 = vmatprep.subr.mxu0 0.0
  %115 = vmatpush1.msra.mxu0 %v46
  %116 = vmatprep.subr.mxu0 0.0
  %117 = vmatpush1.msra.mxu0 %v47
  %118 = vmatprep.subr.mxu0 0.0
  %119 = vmatpush1.msra.mxu0 %v48
  %120 = vmatprep.mubr.f32.mxu0 %v50
  %121 = vmatmul.mubr.f32.gmra.mrb[0].mxu0 %v49
  %v122 = vpop.f32.mrb[0].mxu0
  %v123 = vadd.f32 %v55, %v122
  %v124 = vpop.f32.mrb[0].mxu0
  %125 = vdwg.mxu0
  %v126 = vld [vmem:[%s3] sm:$0xff]
  %v127 = vld [vmem:[%s3 + $0x8] sm:$0xff]
  %v128 = vld [vmem:[%s3 + $0x10] sm:$0xff]
  %v129 = vld [vmem:[%s3 + $0x18] sm:$0xff]
  %v130 = vld [vmem:[%s3 + $0x20] sm:$0xff]
  %v131 = vld [vmem:[%s3 + $0x28] sm:$0xff]
  %v132 = vld [vmem:[%s3 + $0x30] sm:$0xff]
  %v133 = vld [vmem:[%s3 + $0x38] sm:$0xff]
  %v134 = vld [vmem:[%s3 + $0x40] sm:$0xff]
  %v135 = vld [vmem:[%s3 + $0x48] sm:$0xff]
  %v136 = vld [vmem:[%s3 + $0x50] sm:$0xff]
  %v137 = vld [vmem:[%s3 + $0x58] sm:$0xff]
  %v138 = vld [vmem:[%s3 + $0x60] sm:$0xff]
  %v139 = vld [vmem:[%s3 + $0x68] sm:$0xff]
  %v140 = vld [vmem:[%s3 + $0x70] sm:$0xff]
  %v141 = vld [vmem:[%s3 + $0x78] sm:$0xff]
  %142 = vmatprep.subr.mxu0 0.0
  %143 = vmatpush1.msra.mxu0 %v126
  %144 = vmatprep.subr.mxu0 0.0
  %145 = vmatpush1.msra.mxu0 %v127
  %146 = vmatprep.subr.mxu0 0.0
  %147 = vmatpush1.msra.mxu0 %v128
  %148 = vmatprep.subr.mxu0 0.0
  %149 = vmatpush1.msra.mxu0 %v129
  %150 = vmatprep.subr.mxu0 0.0
  %151 = vmatpush1.msra.mxu0 %v130
  %152 = vmatprep.subr.mxu0 0.0
  %153 = vmatpush1.msra.mxu0 %v131
  %154 = vmatprep.subr.mxu0 0.0
  %155 = vmatpush1.msra.mxu0 %v132
  %156 = vmatprep.subr.mxu0 0.0
  %157 = vmatpush1.msra.mxu0 %v133
  %158 = vmatprep.subr.mxu0 0.0
  %159 = vmatpush1.msra.mxu0 %v134
  %160 = vmatprep.subr.mxu0 0.0
  %161 = vmatpush1.msra.mxu0 %v135
  %162 = vmatprep.subr.mxu0 0.0
  %163 = vmatpush1.msra.mxu0 %v136
  %164 = vmatprep.subr.mxu0 0.0
  %165 = vmatpush1.msra.mxu0 %v137
  %166 = vmatprep.subr.mxu0 0.0
  %167 = vmatpush1.msra.mxu0 %v138
  %168 = vmatprep.subr.mxu0 0.0
  %169 = vmatpush1.msra.mxu0 %v139
  %170 = vmatprep.subr.mxu0 0.0
  %171 = vmatpush1.msra.mxu0 %v140
  %172 = vmatprep.subr.mxu0 0.0
  %173 = vmatpush1.msra.mxu0 %v141
  %174 = vmatprep.subr.mxu0 0.0
  %175 = vmatpush1.msra.mxu0 0.0
  %176 = vmatprep.subr.mxu0 0.0
  %177 = vmatpush1.msra.mxu0 0.0
  %178 = vmatprep.subr.mxu0 0.0
  %179 = vmatpush1.msra.mxu0 0.0
  %180 = vmatprep.subr.mxu0 0.0
  %181 = vmatpush1.msra.mxu0 0.0
  %182 = vmatprep.subr.mxu0 0.0
  %183 = vmatpush1.msra.mxu0 0.0
  %184 = vmatprep.subr.mxu0 0.0
  %185 = vmatpush1.msra.mxu0 0.0
  %186 = vmatprep.subr.mxu0 0.0
  %187 = vmatpush1.msra.mxu0 0.0
  %188 = vmatprep.subr.mxu0 0.0
  %189 = vmatpush1.msra.mxu0 0.0
  %190 = vmatprep.subr.mxu0 0.0
  %191 = vmatpush1.msra.mxu0 0.0
  %192 = vmatprep.subr.mxu0 0.0
  %193 = vmatpush1.msra.mxu0 0.0
  %194 = vmatprep.subr.mxu0 0.0
  %195 = vmatpush1.msra.mxu0 0.0
  %196 = vmatprep.subr.mxu0 0.0
  %197 = vmatpush1.msra.mxu0 0.0
  %198 = vmatprep.subr.mxu0 0.0
  %199 = vmatpush1.msra.mxu0 0.0
  %200 = vmatprep.subr.mxu0 0.0
  %201 = vmatpush1.msra.mxu0 0.0
  %202 = vmatprep.subr.mxu0 0.0
  %203 = vmatpush1.msra.mxu0 0.0
  %204 = vmatprep.subr.mxu0 0.0
  %205 = vmatpush1.msra.mxu0 0.0
  %206 = vmatprep.mubr.f32.mxu0 0.0
  %207 = vmatmul.mubr.f32.gmra.mrb[0].mxu0 %v123
  %v208 = vpop.f32.mrb[0].mxu0
  %v209 = vadd.f32 0.0, %v208
  %v210 = vpop.f32.mrb[0].mxu0
  %211 = vdwg.mxu0
  %v212 = vmul.f32 %v123, %v123
  %213 = vmatprep.subr.mxu0 0.0
  %214 = vmatpush1.msra.mxu0 %v126
  %215 = vmatprep.subr.mxu0 0.0
  %216 = vmatpush1.msra.mxu0 %v127
  %217 = vmatprep.subr.mxu0 0.0
  %218 = vmatpush1.msra.mxu0 %v128
  %219 = vmatprep.subr.mxu0 0.0
  %220 = vmatpush1.msra.mxu0 %v129
  %221 = vmatprep.subr.mxu0 0.0
  %222 = vmatpush1.msra.mxu0 %v130
  %223 = vmatprep.subr.mxu0 0.0
  %224 = vmatpush1.msra.mxu0 %v131
  %225 = vmatprep.subr.mxu0 0.0
  %226 = vmatpush1.msra.mxu0 %v132
  %227 = vmatprep.subr.mxu0 0.0
  %228 = vmatpush1.msra.mxu0 %v133
  %229 = vmatprep.subr.mxu0 0.0
  %230 = vmatpush1.msra.mxu0 %v134
  %231 = vmatprep.subr.mxu0 0.0
  %232 = vmatpush1.msra.mxu0 %v135
  %233 = vmatprep.subr.mxu0 0.0
  %234 = vmatpush1.msra.mxu0 %v136
  %235 = vmatprep.subr.mxu0 0.0
  %236 = vmatpush1.msra.mxu0 %v137
  %237 = vmatprep.subr.mxu0 0.0
  %238 = vmatpush1.msra.mxu0 %v138
  %239 = vmatprep.subr.mxu0 0.0
  %240 = vmatpush1.msra.mxu0 %v139
  %241 = vmatprep.subr.mxu0 0.0
  %242 = vmatpush1.msra.mxu0 %v140
  %243 = vmatprep.subr.mxu0 0.0
  %244 = vmatpush1.msra.mxu0 %v141
  %245 = vmatprep.subr.mxu0 0.0
  %246 = vmatpush1.msra.mxu0 0.0
  %247 = vmatprep.subr.mxu0 0.0
  %248 = vmatpush1.msra.mxu0 0.0
  %249 = vmatprep.subr.mxu0 0.0
  %250 = vmatpush1.msra.mxu0 0.0
  %251 = vmatprep.subr.mxu0 0.0
  %252 = vmatpush1.msra.mxu0 0.0
  %253 = vmatprep.subr.mxu0 0.0
  %254 = vmatpush1.msra.mxu0 0.0
  %255 = vmatprep.subr.mxu0 0.0
  %256 = vmatpush1.msra.mxu0 0.0
  %257 = vmatprep.subr.mxu0 0.0
  %258 = vmatpush1.msra.mxu0 0.0
  %259 = vmatprep.subr.mxu0 0.0
  %260 = vmatpush1.msra.mxu0 0.0
  %261 = vmatprep.subr.mxu0 0.0
  %262 = vmatpush1.msra.mxu0 0.0
  %263 = vmatprep.subr.mxu0 0.0
  %264 = vmatpush1.msra.mxu0 0.0
  %265 = vmatprep.subr.mxu0 0.0
  %266 = vmatpush1.msra.mxu0 0.0
  %267 = vmatprep.subr.mxu0 0.0
  %268 = vmatpush1.msra.mxu0 0.0
  %269 = vmatprep.subr.mxu0 0.0
  %270 = vmatpush1.msra.mxu0 0.0
  %271 = vmatprep.subr.mxu0 0.0
  %272 = vmatpush1.msra.mxu0 0.0
  %273 = vmatprep.subr.mxu0 0.0
  %274 = vmatpush1.msra.mxu0 0.0
  %275 = vmatprep.subr.mxu0 0.0
  %276 = vmatpush1.msra.mxu0 0.0
  %277 = vmatprep.mubr.f32.mxu0 0.0
  %278 = vmatmul.mubr.f32.gmra.mrb[0].mxu0 %v212
  %v279 = vpop.f32.mrb[0].mxu0
  %v280 = vadd.f32 0.0, %v279
  %v281 = vpop.f32.mrb[0].mxu0
  %282 = vdwg.mxu0
  %v283 = vmul.f32 %v209, %v209
  %v284 = vsub.f32 %v280, %v283
  %v285 = vmax.f32 %v284, 0.0
  %v286 = vsub.f32 %v123, %v209
  %v287 = vadd.f32 %v285, 1e-05
  %v288 = vrsqrt.pop %v287
  %v289 = vmul.f32 %v286, %v288
  %v290 = vld [vmem:[%s2 + $0x1] sm:$0x1]
  %v291 = vlaneseq
  %v292 = vshrl.u32 %v291, 7
  %v293 = vsub.s32 0, %v292
  %v294 = vrot.slane %v290, %v293
  %v295 = vmul.f32 %v289, %v294
  %v296 = vld [vmem:[%s2 + $0x2] sm:$0x1]
  %v297 = vlaneseq
  %v298 = vshrl.u32 %v297, 7
  %v299 = vsub.s32 0, %v298
  %v300 = vrot.slane %v296, %v299
  %v301 = vadd.f32 %v295, %v300
  %v302 = vmax.f32 %v301, 0.0
  %303 = vst [vmem:[%s4] sm:$0xff] %v302
  // Predicated region
  $region18: #{_lambda_.1} parent=0 // pred_check
    _
  $region19: #{_lambda_.1} parent=0 // pred_check_branch
    %305 = sbr.rel (0) target = $region21
  $region20: #{_lambda_.1} parent=0 // pred_region
    _
  $region21: #{_lambda_.1} parent=0 // pred_fallthru
    _
  // Predicated region
  $region22: #{_lambda_.1} parent=0 // pred_check
    _
  $region23: #{_lambda_.1} parent=0 // pred_check_branch
    %307 = sbr.rel (0) target = $region25
  $region24: #{_lambda_.1} parent=0 // pred_region
    _
  $region25: #{_lambda_.1} parent=0 // pred_fallthru
    _

</llo_original>
